<compile_context>
chip_gen: v7x
topology: tpu7x:2x2x1
jax: 0.10.0
libtpu: 0.0.40
codegen_flags: <defaults>
</compile_context>

<pallas_src>
import jax
import jax.numpy as jnp
from jax.experimental import pallas as pl
from jax.experimental.pallas import tpu as pltpu


def _round_up(x: int, m: int) -> int:
    return ((x + m - 1) // m) * m


def _gmu_kernel(m1_ref, m2_ref, w1_ref, w2_ref, b_ref, o_ref):
    m1 = m1_ref[...]                              # (TB, Dp) input dtype
    m2 = m2_ref[...]                              # (TB, Dp)
    w1 = w1_ref[...].astype(jnp.float32)          # (1,  Dp) lane-dense row
    w2 = w2_ref[...].astype(jnp.float32)          # (1,  Dp)
    b = b_ref[0, 0]                               # scalar bias (SMEM)

    # Gate logit: cat([m1, m2], -1) @ W.T + b, computed as a lane-dense
    # VPU multiply + XLU lane-reduce (no MXU, no (D, 1) padding waste).
    m1f = m1.astype(jnp.float32)
    m2f = m2.astype(jnp.float32)
    logits = (
        jnp.sum(m1f * w1, axis=-1, keepdims=True)
        + jnp.sum(m2f * w2, axis=-1, keepdims=True)
        + b
    )                                             # (TB, 1)
    gate = jax.nn.sigmoid(logits)                 # (TB, 1), f32

    # Blend: gate*m1 + (1-gate)*m2  ==  m2 + gate*(m1 - m2)   (saves a mul+sub)
    gate_c = gate.astype(m1.dtype)
    out = m2 + gate_c * (m1 - m2)                 # (TB, Dp)
    o_ref[...] = out.astype(o_ref.dtype)


# Conservative scoped-VMEM target: above the v5e (16 MiB) / v6e-v7x (32 MiB)
# defaults, safely below v7x's 64 MiB physical VMEM per TensorCore.
_VMEM_LIMIT_BYTES = 48 * 1024 * 1024


def _pick_tile_rows(B: int, d_pad: int, itemsize: int) -> int:
    # 3 (TB, Dp) arrays (m1, m2, out), double-buffered => 6 tiles, plus
    # headroom for f32 intermediates: budget tiles at ~half the VMEM limit.
    tile_budget = _VMEM_LIMIT_BYTES // 2
    max_tb = tile_budget // (6 * d_pad * itemsize)
    max_tb = max(8, (max_tb // 8) * 8)            # multiple of 8 sublanes
    tb = min(max_tb, 1024, _round_up(B, 8))       # big tiles amortize ~0.35us/step
    return max(8, tb)


def gated_multimodal_unit(m1, m2, weight, bias):
    """m1, m2: (B, D); weight: (1, 2D); bias: (1,)."""
    B, D = m1.shape
    assert m2.shape == (B, D)
    assert weight.shape == (1, 2 * D)
    assert bias.shape == (1,)

    dtype = m1.dtype
    itemsize = jnp.dtype(dtype).itemsize

    # Lane-dense padding of the feature dim; zero-padded lanes contribute 0
    # to the logit (weights padded with 0) and are sliced off the output.
    d_pad = _round_up(D, 128)
    tb = _pick_tile_rows(B, d_pad, itemsize)
    b_pad = _round_up(B, tb)
    grid = (b_pad // tb,)

    m1_p = jnp.pad(m1, ((0, b_pad - B), (0, d_pad - D)))
    m2_p = jnp.pad(m2, ((0, b_pad - B), (0, d_pad - D)))

    # Split the gate weight into two lane-dense (1, Dp) rows (no transpose).
    w1 = jnp.pad(weight[:, :D], ((0, 0), (0, d_pad - D)))
    w2 = jnp.pad(weight[:, D:], ((0, 0), (0, d_pad - D)))
    b = bias.reshape(1, 1).astype(jnp.float32)    # scalar bias in SMEM

    cost = pl.CostEstimate(
        flops=6 * b_pad * d_pad,
        transcendentals=b_pad,
        bytes_accessed=3 * b_pad * d_pad * itemsize,
    )

    out_padded = pl.pallas_call(
        _gmu_kernel,
        out_shape=jax.ShapeDtypeStruct((b_pad, d_pad), dtype),
        grid=grid,
        in_specs=[
            pl.BlockSpec((tb, d_pad), lambda i: (i, 0)),
            pl.BlockSpec((tb, d_pad), lambda i: (i, 0)),
            pl.BlockSpec((1, d_pad), lambda i: (0, 0)),   # constant => no re-fetch
            pl.BlockSpec((1, d_pad), lambda i: (0, 0)),
            pl.BlockSpec((1, 1), lambda i: (0, 0), memory_space=pltpu.SMEM),
        ],
        out_specs=pl.BlockSpec((tb, d_pad), lambda i: (i, 0)),
        compiler_params=pltpu.CompilerParams(
            dimension_semantics=("parallel",),            # megacore on v7x
            vmem_limit_bytes=_VMEM_LIMIT_BYTES,
        ),
        cost_estimate=cost,
    )(m1_p, m2_p, w1, w2, b)

    return out_padded[:B, :D]


def _reference(m1, m2, weight, bias):
    combined = jnp.concatenate([m1, m2], axis=1)
    gate = jax.nn.sigmoid(combined @ weight.T + bias)
    return gate * m1 + (1.0 - gate) * m2


if __name__ == "__main__":
    B, D = 8, 32
    key = jax.random.PRNGKey(0)
    k1, k2, kw, kb = jax.random.split(key, 4)

    m1 = jax.random.normal(k1, (B, D), dtype=jnp.float32)
    m2 = jax.random.normal(k2, (B, D), dtype=jnp.float32)

    # Deterministic Linear(2D, 1) init (PyTorch-style uniform(-1/sqrt(fan_in), +)).
    bound = 1.0 / jnp.sqrt(jnp.float32(2 * D))
    weight = jax.random.uniform(kw, (1, 2 * D), jnp.float32, -bound, bound)
    bias = jax.random.uniform(kb, (1,), jnp.float32, -bound, bound)

    out = gated_multimodal_unit(m1, m2, weight, bias)
    jax.block_until_ready(out)

    ref = _reference(m1, m2, weight, bias)
    assert out.shape == (B, D)
    assert jnp.allclose(out, ref, atol=1e-5, rtol=1e-5), "mismatch vs reference"

    print("KERNEL_OK")
</pallas_src>

<mosaic_0001>
module attributes {stable_mosaic.version = 11 : i64} {
  func.func @_gmu_kernel(%arg0: i32, %arg1: memref<8x128xf32, #tpu.memory_space<vmem>>, %arg2: memref<8x128xf32, #tpu.memory_space<vmem>>, %arg3: memref<1x128xf32, #tpu.memory_space<vmem>>, %arg4: memref<1x128xf32, #tpu.memory_space<vmem>>, %arg5: memref<1x1xf32, #tpu.memory_space<smem>>, %arg6: memref<8x128xf32, #tpu.memory_space<vmem>>) attributes {dimension_semantics = [#tpu.dimension_semantics<parallel>], iteration_bounds = array<i64: 1>, scalar_prefetch = 0 : i64, scratch_operands = 0 : i64, tpu.core_type = #tpu.core_type<tc>, window_params = [{transform_indices = @transform_0, window_bounds = array<i64: 8, 128>}, {transform_indices = @transform_1, window_bounds = array<i64: 8, 128>}, {pipeline_mode = #tpu.pipeline_mode<synchronous>, transform_indices = @transform_2, window_bounds = array<i64: 1, 128>}, {pipeline_mode = #tpu.pipeline_mode<synchronous>, transform_indices = @transform_3, window_bounds = array<i64: 1, 128>}, {transform_indices = @transform_4, window_bounds = array<i64: 1, 1>}, {transform_indices = @transform_5, window_bounds = array<i64: 8, 128>}]} {
    %c0 = arith.constant 0 : index
    %c0_0 = arith.constant 0 : index
    %0 = vector.load %arg1[%c0, %c0_0] : memref<8x128xf32, #tpu.memory_space<vmem>>, vector<8x128xf32>
    %c0_1 = arith.constant 0 : index
    %c0_2 = arith.constant 0 : index
    %1 = vector.load %arg2[%c0_1, %c0_2] : memref<8x128xf32, #tpu.memory_space<vmem>>, vector<8x128xf32>
    %c0_3 = arith.constant 0 : index
    %c0_4 = arith.constant 0 : index
    %2 = vector.load %arg3[%c0_3, %c0_4] : memref<1x128xf32, #tpu.memory_space<vmem>>, vector<1x128xf32>
    %c0_5 = arith.constant 0 : index
    %c0_6 = arith.constant 0 : index
    %3 = vector.load %arg4[%c0_5, %c0_6] : memref<1x128xf32, #tpu.memory_space<vmem>>, vector<1x128xf32>
    %c0_7 = arith.constant 0 : index
    %c0_8 = arith.constant 0 : index
    %4 = memref.load %arg5[%c0_7, %c0_8] : memref<1x1xf32, #tpu.memory_space<smem>>
    %5 = vector.broadcast %2 : vector<1x128xf32> to vector<8x128xf32>
    %6 = arith.mulf %0, %5 : vector<8x128xf32>
    %cst = arith.constant dense<0.000000e+00> : vector<8xf32>
    %7 = vector.multi_reduction <add>, %6, %cst [1] : vector<8x128xf32> to vector<8xf32>
    %8 = vector.shape_cast %7 : vector<8xf32> to vector<8x1xf32>
    %9 = vector.broadcast %3 : vector<1x128xf32> to vector<8x128xf32>
    %10 = arith.mulf %1, %9 : vector<8x128xf32>
    %cst_9 = arith.constant dense<0.000000e+00> : vector<8xf32>
    %11 = vector.multi_reduction <add>, %10, %cst_9 [1] : vector<8x128xf32> to vector<8xf32>
    %12 = vector.shape_cast %11 : vector<8xf32> to vector<8x1xf32>
    %13 = arith.addf %8, %12 : vector<8x1xf32>
    %14 = vector.broadcast %4 : f32 to vector<8x1xf32>
    %15 = arith.addf %13, %14 : vector<8x1xf32>
    %16 = arith.negf %15 : vector<8x1xf32>
    %17 = math.exp %16 : vector<8x1xf32>
    %cst_10 = arith.constant 1.000000e+00 : f32
    %18 = vector.broadcast %cst_10 : f32 to vector<8x1xf32>
    %19 = arith.addf %18, %17 : vector<8x1xf32>
    %20 = arith.divf %18, %19 : vector<8x1xf32>
    %21 = arith.subf %0, %1 : vector<8x128xf32>
    %22 = vector.broadcast %20 : vector<8x1xf32> to vector<8x128xf32>
    %23 = arith.mulf %22, %21 : vector<8x128xf32>
    %24 = arith.addf %1, %23 : vector<8x128xf32>
    %c0_11 = arith.constant 0 : index
    %c0_12 = arith.constant 0 : index
    %25 = vector.load %arg6[%c0_11, %c0_12] : memref<8x128xf32, #tpu.memory_space<vmem>>, vector<8x128xf32>
    tpu.vector_store %arg6[%c0_11, %c0_12], %24 {strides = array<i32>} : memref<8x128xf32, #tpu.memory_space<vmem>>, vector<8x128xf32>,
    return
  }
  func.func @transform_0(%arg0: i32) -> (i32, i32) {
    %c0_i32 = arith.constant 0 : i32
    %c0_i32_0 = arith.constant 0 : i32
    return %arg0, %c0_i32 : i32, i32
  }
  func.func @transform_1(%arg0: i32) -> (i32, i32) {
    %c0_i32 = arith.constant 0 : i32
    %c0_i32_0 = arith.constant 0 : i32
    return %arg0, %c0_i32 : i32, i32
  }
  func.func @transform_2(%arg0: i32) -> (i32, i32) {
    %c0_i32 = arith.constant 0 : i32
    %c0_i32_0 = arith.constant 0 : i32
    %c0_i32_1 = arith.constant 0 : i32
    return %c0_i32, %c0_i32_0 : i32, i32
  }
  func.func @transform_3(%arg0: i32) -> (i32, i32) {
    %c0_i32 = arith.constant 0 : i32
    %c0_i32_0 = arith.constant 0 : i32
    %c0_i32_1 = arith.constant 0 : i32
    return %c0_i32, %c0_i32_0 : i32, i32
  }
  func.func @transform_4(%arg0: i32) -> (i32, i32) {
    %c0_i32 = arith.constant 0 : i32
    %c0_i32_0 = arith.constant 0 : i32
    %c0_i32_1 = arith.constant 0 : i32
    return %c0_i32, %c0_i32_0 : i32, i32
  }
  func.func @transform_5(%arg0: i32) -> (i32, i32) {
    %c0_i32 = arith.constant 0 : i32
    %c0_i32_0 = arith.constant 0 : i32
    return %arg0, %c0_i32 : i32, i32
  }
}

</mosaic_0001>

<llo_original>
// kernel: tpu_custom_call.1
$region0: #{tpu_custom_call.1}
  #allocation0 [shape = 'u32[]', space=smem, size = 0x4, offset = 0x4, fixed_abs, tag = 'smem constant byte address 0x4 - core index']
  #allocation1 [shape = 'u32[144,128]{1,0:T(1,128)}', space=vmem, size = 0x12000, scoped, tag = 'internal scratch']
  #allocation2 [shape = 'f32[1,1]{1,0:T(1,128)S(6)}', space=smem, size = 0x200, scoped, tag = 'scoped memory for tpu_custom_call.1']
  %s0 = inlined_call_operand.hbm [shape: f32[8,128], index: 0, kind: input, shape index: {}]
  %s1 = inlined_call_operand.hbm [shape: f32[8,128], index: 1, kind: input, shape index: {}]
  %s2 = inlined_call_operand.vmem [shape: f32[1,128], index: 2, kind: input, shape index: {}]
  %s3 = inlined_call_operand.vmem [shape: f32[1,128], index: 3, kind: input, shape index: {}]
  %s4 = inlined_call_operand.<no memory space> [shape: f32[1,1], index: 4, kind: input, shape index: {}]
  %s5 = inlined_call_operand.hbm [shape: f32[8,128], index: 5, kind: output, shape index: {}]
  %s6 = sld [smem:[#allocation0]]
  $region38: #{tpu_custom_call.1} parent=0
    _
  %s8 = ssub.s32 1, %s6
  %s9 = scalar_select 0, %s8, %s6
  %10 = sst [smem:[#allocation2]] %s4
  $region1: #{tpu_custom_call.1} parent=0
    #allocation3 [shape = 'u8[4096]{0}', space=vmem, size = 0x1000, scoped, tag = 'input window, operand 0, single buffered']
    #allocation4 [shape = 's32[1]{0}', space=sflag, size = 0x4, scoped, tag = 'scoped memory for tpu_custom_call.1']
    #allocation5 [shape = 's32[1]{0}', space=sflag, size = 0x4, scoped, tag = 'scoped memory for tpu_custom_call.1']
    #allocation6 [shape = 'u8[4096]{0}', space=vmem, size = 0x1000, scoped, tag = 'input window, operand 1, single buffered']
    #allocation7 [shape = 's32[1]{0}', space=sflag, size = 0x4, scoped, tag = 'scoped memory for tpu_custom_call.1']
    #allocation8 [shape = 'u8[4096]{0}', space=vmem, size = 0x1000, scoped, tag = 'output window, operand 0, single buffered']
    %11 = vsyncpa [#allocation4], 0
    %12 = vsyncpa [#allocation7], 0
    %13 = vsyncpa [#allocation5], 0
    // Predicated region
    $region2: #{tpu_custom_call.1} parent=1 // pred_check
      _
    $region3: #{tpu_custom_call.1} parent=1 // pred_check_branch
      %15 = sbr.rel (0) target = $region5
    $region4: #{tpu_custom_call.1} parent=1 // pred_region
      %s17 = ssub.s32 128, 128
      %18 = vsyncadd [#allocation4], %s17
      %s20 = sshll.u32 [#allocation3], 4
      %s21 = int_to_ptr.vmem [resolvable:$true] %s20
      %23 = dma.hbm_to_vmem [thread:$0]  %s0, 128, %s21, [#allocation4]
    $region5: #{tpu_custom_call.1} parent=1 // pred_fallthru
      _
    // Predicated region
    $region6: #{tpu_custom_call.1} parent=1 // pred_check
      _
    $region7: #{tpu_custom_call.1} parent=1 // pred_check_branch
      %25 = sbr.rel (0) target = $region9
    $region8: #{tpu_custom_call.1} parent=1 // pred_region
      %s27 = ssub.s32 128, 128
      %28 = vsyncadd [#allocation7], %s27
      %s30 = sshll.u32 [#allocation6], 4
      %s31 = int_to_ptr.vmem [resolvable:$true] %s30
      %33 = dma.hbm_to_vmem [thread:$0]  %s1, 128, %s31, [#allocation7]
    $region9: #{tpu_custom_call.1} parent=1 // pred_fallthru
      _
    // Predicated region
    $region10: #{tpu_custom_call.1} parent=1 // pred_check
      _
    $region11: #{tpu_custom_call.1} parent=1 // pred_check_branch
      %35 = sbr.rel (0) target = $region13
    $region12: #{tpu_custom_call.1} parent=1 // pred_region
      _
    $region13: #{tpu_custom_call.1} parent=1 // pred_fallthru
      _
    // Predicated region
    $region14: #{tpu_custom_call.1} parent=1 // pred_check
      _
    $region15: #{tpu_custom_call.1} parent=1 // pred_check_branch
      %37 = sbr.rel (0) target = $region17
    $region16: #{tpu_custom_call.1} parent=1 // pred_region
      _
    $region17: #{tpu_custom_call.1} parent=1 // pred_fallthru
      _
    // Predicated region
    $region18: #{tpu_custom_call.1} parent=1 // pred_check
      _
    $region19: #{tpu_custom_call.1} parent=1 // pred_check_branch
      %39 = sbr.rel (0) target = $region21
    $region20: #{tpu_custom_call.1} parent=1 // pred_region
      _
    $region21: #{tpu_custom_call.1} parent=1 // pred_fallthru
      _
    // Predicated region
    $region22: #{tpu_custom_call.1} parent=1 // pred_check
      _
    $region23: #{tpu_custom_call.1} parent=1 // pred_check_branch
      %41 = sbr.rel (0) target = $region25
    $region24: #{tpu_custom_call.1} parent=1 // pred_region
      %42 = dma.done [#allocation4], 128
    $region25: #{tpu_custom_call.1} parent=1 // pred_fallthru
      _
    // Predicated region
    $region26: #{tpu_custom_call.1} parent=1 // pred_check
      _
    $region27: #{tpu_custom_call.1} parent=1 // pred_check_branch
      %44 = sbr.rel (0) target = $region29
    $region28: #{tpu_custom_call.1} parent=1 // pred_region
      %45 = dma.done [#allocation7], 128
    $region29: #{tpu_custom_call.1} parent=1 // pred_fallthru
      _
    %v46 = vld [vmem:[#allocation3] sm:$0xff]
    %v47 = vld [vmem:[#allocation6] sm:$0xff]
    %v48 = vld [vmem:[%s2] sm:$0x1]
    %v49 = vld [vmem:[%s3] sm:$0x1]
    %s50 = sld [smem:[#allocation2]]
    %v52 = vlaneseq
    %v53 = vshrl.u32 %v52, 7
    %v54 = vsub.s32 0, %v53
    %v55 = vrot.slane %v48, %v54
    %v57 = vmul.f32 %v46, %v55
    %58 = vadd.xlane.f32.xlu0 %v57
    %v59 = vpop.xlane.xlu0 %58
    %v61 = vlaneseq
    %v62 = vshrl.u32 %v61, 7
    %v63 = vsub.s32 0, %v62
    %v64 = vrot.slane %v49, %v63
    %v66 = vmul.f32 %v47, %v64
    %67 = vadd.xlane.f32.xlu0 %v66
    %v68 = vpop.xlane.xlu0 %67
    %v69 = vadd.f32 %v59, %v68
    %v70 = vstv %s50
    %v71 = vadd.f32 %v69, %v70
    %v72 = vxor.u32 %v71, 2147483648
    %v73 = vmul.f32 %v72, 1.442695
    %v74 = vpow.pop %v73
    %v75 = vadd.f32 %v74, 1.0
    %v76 = vrcp.pop %v75
    %v77 = vmul.f32 1.0, %v76
    %v78 = vsub.f32 %v46, %v47
    %v79 = vmul.f32 %v77, %v78
    %v80 = vadd.f32 %v47, %v79
    %81 = vst [vmem:[#allocation8] sm:$0xff] %v80
    // Predicated region
    $region30: #{tpu_custom_call.1} parent=1 // pred_check
      _
    $region31: #{tpu_custom_call.1} parent=1 // pred_check_branch
      %83 = sbr.rel (0) target = $region33
    $region32: #{tpu_custom_call.1} parent=1 // pred_region
      %s85 = ssub.s32 128, 128
      %86 = vsyncadd [#allocation5], %s85
      %s88 = sshll.u32 [#allocation8], 4
      %s89 = int_to_ptr.vmem [resolvable:$true] %s88
      %91 = dma.vmem_to_hbm [thread:$0]  %s89, 128, %s5, [#allocation5]
    $region33: #{tpu_custom_call.1} parent=1 // pred_fallthru
      _
    // Predicated region
    $region34: #{tpu_custom_call.1} parent=1 // pred_check
      _
    $region35: #{tpu_custom_call.1} parent=1 // pred_check_branch
      %93 = sbr.rel (0) target = $region37
    $region36: #{tpu_custom_call.1} parent=1 // pred_region
      %94 = dma.done [#allocation5], 128
    $region37: #{tpu_custom_call.1} parent=1 // pred_fallthru
      _
    %95 = vsyncpa [#allocation4], 1
    %96 = vsyncpa [#allocation7], 1
    %97 = vsyncpa [#allocation5], 1

</llo_original>
